<compile_context>
chip_gen: v7x
topology: tpu7x:2x2x1
jax: 0.10.0
libtpu: 0.0.40
codegen_flags: <defaults>
</compile_context>

<pallas_src>
import jax
import jax.numpy as jnp
from jax.experimental import pallas as pl
from jax.experimental.pallas import tpu as pltpu

_LANE = 128      # vreg lane width
_SUBLANE = 8     # f32 sublane multiple


# --------------------------------------------------------------------------- #
# Kernels
# --------------------------------------------------------------------------- #
def _proj_kernel_lane_dense(x_ref, w_ref, o_ref):
    """x_ref: (T, P*N)   w_ref: (P*N, D*N)   o_ref: (T, D*N).

    One lane-dense 2-D MXU matmul per grid step; o_ref rows are already the
    row-major layout of out[t, d, n], so no in-kernel transposes are needed.
    """
    o_ref[...] = jnp.dot(
        x_ref[...], w_ref[...], preferred_element_type=jnp.float32
    ).astype(o_ref.dtype)


def _proj_kernel_general(x_ref, w_ref, o_ref):
    """Fallback: x_ref: (T, P, N)   w_ref: (P, D)   o_ref: (T, N, D)."""
    o_ref[...] = jnp.einsum(
        "tpn,pd->tnd", x_ref[...], w_ref[...],
        preferred_element_type=jnp.float32,
    ).astype(o_ref.dtype)


# --------------------------------------------------------------------------- #
# VMEM-aware tiling helpers
# --------------------------------------------------------------------------- #
def _round_up(v, m):
    return ((v + m - 1) // m) * m


def _vmem_budget_bytes():
    """Generation-aware budget for the double-buffered working set."""
    try:
        cap = pltpu.get_tpu_info().vmem_capacity_bytes
    except Exception:
        cap = 64 * 1024 * 1024            # conservative fallback: v7x = 64 MiB/TC
    # Leave ~40% of physical VMEM as headroom for Mosaic scratch / regalloc.
    return min(int(cap * 0.6), 48 * 1024 * 1024)


def _pick_block_rows(rows, t_cap):
    """Largest T <= t_cap that divides rows, preferring multiples of 8.

    T must divide rows so no padding is needed (jnp.pad of x would be a full
    extra HBM read+write pass on a memory-bound kernel).
    """
    t_cap = max(1, min(int(t_cap), rows))
    if t_cap >= rows:
        return rows
    largest = 1
    for t in range(t_cap, 0, -1):
        if rows % t == 0:
            if t % _SUBLANE == 0:
                return t                  # sublane-aligned divisor: best choice
            if largest == 1:
                largest = t               # largest plain divisor as fallback
    return largest


def _cap_for_overlap(rows, t_budget):
    """Cap T at ~1K rows and keep >= 8 grid steps so double-buffering overlaps."""
    t_cap = min(int(t_budget), 1024)
    if rows >= 64:
        t_cap = min(t_cap, max(8, rows // 8))
    return max(1, t_cap)


def _use_block_weight(P, N, D, itemsize, budget):
    """Use the lane-dense block-structured-weight path?

    Requires (a) the (P*N, D*N) weight to stay resident in a fraction of the
    VMEM budget and (b) the factor-N extra MXU flops to keep the kernel under
    the HBM roofline even on v5e (~240 flop/byte; 220 leaves margin).
    """
    K, DN = P * N, D * N
    flops_per_byte = 2.0 * K * DN / ((K + DN) * itemsize)
    wbig_vmem = 2 * _round_up(K, _SUBLANE) * _round_up(DN, _LANE) * itemsize
    return flops_per_byte <= 220.0 and wbig_vmem <= budget // 3


# --------------------------------------------------------------------------- #
# Forward paths
# --------------------------------------------------------------------------- #
def _forward_block_weight(x, weight, B, M, P, N, D, block_rows, budget):
    rows, K, DN = B * M, P * N, D * N
    itemsize = jnp.dtype(x.dtype).itemsize

    # Free view: (B, M, P, N) row-major -> (rows, P*N).
    x2 = x.reshape(rows, K)
    # Block-structured weight: Wbig[p*N + n, d*N + n'] = W[d, p] * (n == n').
    eye = jnp.eye(N, dtype=weight.dtype)
    wbig = jnp.einsum("dp,nm->pndm", weight, eye).reshape(K, DN)

    if block_rows is None:
        # Budget PADDED VMEM tiles: double-buffered in/out blocks, resident
        # (double-buffered) weight, in-kernel f32 accumulator + cast copy.
        k_pad = _round_up(K, _LANE)
        dn_pad = _round_up(DN, _LANE)
        w_vmem = 2 * _round_up(K, _SUBLANE) * dn_pad * itemsize
        per_row = (2 * k_pad * itemsize           # input block, 2 buffers
                   + 2 * dn_pad * itemsize        # output block, 2 buffers
                   + dn_pad * 4                   # f32 MXU accumulator
                   + dn_pad * itemsize)           # astype copy (slack)
        block_rows = _cap_for_overlap(rows, max(1, (budget - w_vmem) // per_row))
    T = _pick_block_rows(rows, block_rows)
    grid = (rows // T,)

    cost = pl.CostEstimate(
        flops=2 * rows * K * DN,
        transcendentals=0,
        bytes_accessed=itemsize * (rows * K + K * DN + rows * DN),
    )

    out2 = pl.pallas_call(
        _proj_kernel_lane_dense,
        out_shape=jax.ShapeDtypeStruct((rows, DN), x.dtype),
        grid_spec=pltpu.PrefetchScalarGridSpec(
            num_scalar_prefetch=0,
            grid=grid,
            in_specs=[
                pl.BlockSpec((T, K), lambda i: (i, 0)),    # lane-dense row slab
                pl.BlockSpec((K, DN), lambda i: (0, 0)),   # weight resident in VMEM
            ],
            out_specs=pl.BlockSpec((T, DN), lambda i: (i, 0)),
        ),
        compiler_params=pltpu.CompilerParams(
            dimension_semantics=("parallel",),   # v7x: row blocks split across TCs
            vmem_limit_bytes=budget + (8 << 20),
        ),
        cost_estimate=cost,
    )(x2, wbig)

    # (rows, D*N) is already the row-major layout of (B, M, D, N): free reshape,
    # no extra HBM transpose pass.
    return out2.reshape(B, M, D, N)


def _forward_general(x, weight, B, M, P, N, D, block_rows, budget):
    """Fallback for shapes where the block-structured weight no longer fits."""
    rows = B * M
    itemsize = jnp.dtype(x.dtype).itemsize
    x3 = x.reshape(rows, P, N)                    # contiguous view
    w_t = jnp.transpose(weight)                   # (P, D): lane-dense MXU RHS

    if block_rows is None:
        p_sub, n_lane = _round_up(P, _SUBLANE), _round_up(N, _LANE)
        n_sub, d_lane = _round_up(N, _SUBLANE), _round_up(D, _LANE)
        w_vmem = 2 * p_sub * d_lane * itemsize
        per_row = (2 * p_sub * n_lane * itemsize          # input block, 2 buffers
                   + 2 * n_sub * d_lane * itemsize        # output block, 2 buffers
                   + n_sub * _round_up(P, _LANE) * itemsize  # in-kernel relayout
                   + n_sub * d_lane * 4)                  # f32 accumulator
        block_rows = _cap_for_overlap(rows, max(1, (budget - w_vmem) // per_row))
    T = _pick_block_rows(rows, block_rows)
    grid = (rows // T,)

    cost = pl.CostEstimate(
        flops=2 * rows * N * D * P,
        transcendentals=0,
        bytes_accessed=itemsize * (rows * P * N + P * D + rows * N * D),
    )

    out3 = pl.pallas_call(
        _proj_kernel_general,
        out_shape=jax.ShapeDtypeStruct((rows, N, D), x.dtype),
        grid_spec=pltpu.PrefetchScalarGridSpec(
            num_scalar_prefetch=0,
            grid=grid,
            in_specs=[
                pl.BlockSpec((T, P, N), lambda i: (i, 0, 0)),
                pl.BlockSpec((P, D), lambda i: (0, 0)),
            ],
            out_specs=pl.BlockSpec((T, N, D), lambda i: (i, 0, 0)),
        ),
        compiler_params=pltpu.CompilerParams(
            dimension_semantics=("parallel",),
            vmem_limit_bytes=budget + (8 << 20),
        ),
        cost_estimate=cost,
    )(x3, w_t)

    out = out3.reshape(B, M, N, D)
    # TODO(synk): when N >= 128, emit (T, D, N) directly in-kernel (lane-dense
    # stores) to drop this extra HBM transpose pass; only the fallback path
    # (large P*N / D*N) ever reaches here.
    return jnp.transpose(out, (0, 1, 3, 2))


def linear_projection_layer(x, weight, *, block_rows=None, compute_dtype=None,
                            force_general=False):
    """out[b, m, d, n] = sum_p weight[d, p] * x[b, m, p, n]  ->  (B, M, D, N).

    compute_dtype: optionally run I/O in a narrower dtype (e.g. jnp.bfloat16,
    f32 MXU accumulation either way) — ~2x less HBM traffic on this HBM-bound
    kernel.  Default keeps x's dtype to match the PyTorch module exactly.
    """
    B, M, P, N = x.shape
    D, Pw = weight.shape
    assert Pw == P, "weight inner dim must match patch_size"

    if compute_dtype is not None:
        x = x.astype(compute_dtype)
        weight = weight.astype(compute_dtype)

    budget = _vmem_budget_bytes()
    itemsize = jnp.dtype(x.dtype).itemsize
    if (not force_general) and _use_block_weight(P, N, D, itemsize, budget):
        return _forward_block_weight(x, weight, B, M, P, N, D, block_rows, budget)
    return _forward_general(x, weight, B, M, P, N, D, block_rows, budget)


# --------------------------------------------------------------------------- #
# Reference + self-test
# --------------------------------------------------------------------------- #
def _reference(x, weight):
    """Pure-JAX mirror of the PyTorch forward (full-precision matmul)."""
    B, M, P, N = x.shape
    xt = jnp.transpose(x, (0, 1, 3, 2)).reshape(B, M, N, P)
    y = jnp.einsum("bmnp,dp->bmnd", xt, weight,
                   precision=jax.lax.Precision.HIGHEST)
    return jnp.transpose(y, (0, 1, 3, 2))


if __name__ == "__main__":
    key = jax.random.PRNGKey(0)
    # batch, num_vars, patch_size, num_patches, d_model
    B, M, P, N, D = 2, 4, 8, 16, 32
    kx, kw, kx2 = jax.random.split(key, 3)

    # Quantize inputs to values exactly representable in bf16/f32 so the check
    # is bit-exact regardless of MXU pass-precision policy.
    x = jnp.round(jax.random.normal(kx, (B, M, P, N), dtype=jnp.float32) * 4.0) / 4.0
    bound = 1.0 / (P ** 0.5)   # Kaiming-uniform-like init for nn.Linear(P, D)
    weight = jax.random.uniform(kw, (D, P), minval=-bound, maxval=bound,
                                dtype=jnp.float32)
    weight = jnp.round(weight * 16.0) / 16.0

    out = jax.block_until_ready(linear_projection_layer(x, weight))
    assert out.shape == (B, M, D, N), out.shape
    assert jnp.allclose(out, _reference(x, weight), atol=1e-6, rtol=1e-6), \
        "mismatch vs reference (single-block grid)"

    # Second config: multi-step grid (rows = 64 -> 8 row blocks) exercising the
    # resident block-structured weight across grid steps.
    B2, M2 = 4, 16
    x2 = jnp.round(jax.random.normal(kx2, (B2, M2, P, N), dtype=jnp.float32) * 4.0) / 4.0
    out2 = jax.block_until_ready(linear_projection_layer(x2, weight))
    assert out2.shape == (B2, M2, D, N), out2.shape
    assert jnp.allclose(out2, _reference(x2, weight), atol=1e-6, rtol=1e-6), \
        "mismatch vs reference (multi-block grid)"

    print("KERNEL_OK")
</pallas_src>

<mosaic_0001>
module attributes {stable_mosaic.version = 11 : i64} {
  func.func @_proj_kernel_lane_dense(%arg0: i32, %arg1: memref<8x128xf32, #tpu.memory_space<vmem>>, %arg2: memref<128x512xf32, #tpu.memory_space<vmem>>, %arg3: memref<8x512xf32, #tpu.memory_space<vmem>>) attributes {dimension_semantics = [#tpu.dimension_semantics<parallel>], iteration_bounds = array<i64: 1>, scalar_prefetch = 0 : i64, scratch_operands = 0 : i64, tpu.core_type = #tpu.core_type<tc>, window_params = [{transform_indices = @transform_0, window_bounds = array<i64: 8, 128>}, {pipeline_mode = #tpu.pipeline_mode<synchronous>, transform_indices = @transform_1, window_bounds = array<i64: 128, 512>}, {transform_indices = @transform_2, window_bounds = array<i64: 8, 512>}]} {
    %c0 = arith.constant 0 : index
    %c0_0 = arith.constant 0 : index
    %0 = vector.load %arg1[%c0, %c0_0] : memref<8x128xf32, #tpu.memory_space<vmem>>, vector<8x128xf32>
    %c0_1 = arith.constant 0 : index
    %c0_2 = arith.constant 0 : index
    %1 = vector.load %arg2[%c0_1, %c0_2] : memref<128x512xf32, #tpu.memory_space<vmem>>, vector<128x512xf32>
    %cst = arith.constant dense<0.000000e+00> : vector<8x512xf32>
    %2 = tpu.matmul %0, %1, %cst {dimension_numbers = #tpu.dot_dimension_numbers<[1], [0], [0], [1], [0, 0, 1, 1], [], []>} : vector<8x128xf32>, vector<128x512xf32>, vector<8x512xf32> -> vector<8x512xf32>
    %c0_3 = arith.constant 0 : index
    %c0_4 = arith.constant 0 : index
    %3 = vector.load %arg3[%c0_3, %c0_4] : memref<8x512xf32, #tpu.memory_space<vmem>>, vector<8x512xf32>
    tpu.vector_store %arg3[%c0_3, %c0_4], %2 {strides = array<i32>} : memref<8x512xf32, #tpu.memory_space<vmem>>, vector<8x512xf32>,
    return
  }
  func.func @transform_0(%arg0: i32) -> (i32, i32) {
    %c0_i32 = arith.constant 0 : i32
    %c0_i32_0 = arith.constant 0 : i32
    return %arg0, %c0_i32 : i32, i32
  }
  func.func @transform_1(%arg0: i32) -> (i32, i32) {
    %c0_i32 = arith.constant 0 : i32
    %c0_i32_0 = arith.constant 0 : i32
    %c0_i32_1 = arith.constant 0 : i32
    return %c0_i32, %c0_i32_0 : i32, i32
  }
  func.func @transform_2(%arg0: i32) -> (i32, i32) {
    %c0_i32 = arith.constant 0 : i32
    %c0_i32_0 = arith.constant 0 : i32
    return %arg0, %c0_i32 : i32, i32
  }
}

</mosaic_0001>

<llo_original>
// kernel: tpu_custom_call.1
$region0: #{tpu_custom_call.1}
  #allocation0 [shape = 'u32[]', space=smem, size = 0x4, offset = 0x4, fixed_abs, tag = 'smem constant byte address 0x4 - core index']
  #allocation1 [shape = 'u32[144,128]{1,0:T(1,128)}', space=vmem, size = 0x12000, scoped, tag = 'internal scratch']
  %s0 = inlined_call_operand.hbm [shape: f32[8,128], index: 0, kind: input, shape index: {}]
  %s1 = inlined_call_operand.hbm [shape: f32[128,512], index: 1, kind: input, shape index: {}]
  %s2 = inlined_call_operand.hbm [shape: f32[8,512], index: 2, kind: output, shape index: {}]
  %s3 = sld [smem:[#allocation0]]
  $region26: #{tpu_custom_call.1} parent=0
    _
  %s5 = ssub.s32 1, %s3
  %s6 = scalar_select 0, %s5, %s3
  $region1: #{tpu_custom_call.1} parent=0
    #allocation2 [shape = 'u8[4096]{0}', space=vmem, size = 0x1000, scoped, tag = 'input window, operand 0, single buffered']
    #allocation3 [shape = 's32[1]{0}', space=sflag, size = 0x4, scoped, tag = 'scoped memory for tpu_custom_call.1']
    #allocation4 [shape = 's32[1]{0}', space=sflag, size = 0x4, scoped, tag = 'scoped memory for tpu_custom_call.1']
    #allocation5 [shape = 'u8[262144]{0}', space=vmem, size = 0x40000, scoped, tag = 'input window, operand 1, single buffered']
    #allocation6 [shape = 's32[1]{0}', space=sflag, size = 0x4, scoped, tag = 'scoped memory for tpu_custom_call.1']
    #allocation7 [shape = 'u8[16384]{0}', space=vmem, size = 0x4000, scoped, tag = 'output window, operand 0, single buffered']
    %7 = vsyncpa [#allocation3], 0
    %8 = vsyncpa [#allocation6], 0
    %9 = vsyncpa [#allocation4], 0
    // Predicated region
    $region2: #{tpu_custom_call.1} parent=1 // pred_check
      _
    $region3: #{tpu_custom_call.1} parent=1 // pred_check_branch
      %11 = sbr.rel (0) target = $region5
    $region4: #{tpu_custom_call.1} parent=1 // pred_region
      %s13 = ssub.s32 128, 128
      %14 = vsyncadd [#allocation3], %s13
      %s16 = sshll.u32 [#allocation2], 4
      %s17 = int_to_ptr.vmem [resolvable:$true] %s16
      %19 = dma.hbm_to_vmem [thread:$0]  %s0, 128, %s17, [#allocation3]
    $region5: #{tpu_custom_call.1} parent=1 // pred_fallthru
      _
    // Predicated region
    $region6: #{tpu_custom_call.1} parent=1 // pred_check
      _
    $region7: #{tpu_custom_call.1} parent=1 // pred_check_branch
      %21 = sbr.rel (0) target = $region9
    $region8: #{tpu_custom_call.1} parent=1 // pred_region
      %s23 = ssub.s32 8192, 8192
      %24 = vsyncadd [#allocation6], %s23
      %s25 = sshll.u32 [#allocation5], 4
      %s26 = int_to_ptr.vmem [resolvable:$true] %s25
      %31 = dma.hbm_to_vmem [thread:$0]  %s1, 8192, %s26, [#allocation6], 512, 512, 32
    $region9: #{tpu_custom_call.1} parent=1 // pred_fallthru
      _
    // Predicated region
    $region10: #{tpu_custom_call.1} parent=1 // pred_check
      _
    $region11: #{tpu_custom_call.1} parent=1 // pred_check_branch
      %33 = sbr.rel (0) target = $region13
    $region12: #{tpu_custom_call.1} parent=1 // pred_region
      %34 = dma.done [#allocation3], 128
    $region13: #{tpu_custom_call.1} parent=1 // pred_fallthru
      _
    // Predicated region
    $region14: #{tpu_custom_call.1} parent=1 // pred_check
      _
    $region15: #{tpu_custom_call.1} parent=1 // pred_check_branch
      %36 = sbr.rel (0) target = $region17
    $region16: #{tpu_custom_call.1} parent=1 // pred_region
      %37 = dma.done [#allocation6], 8192
    $region17: #{tpu_custom_call.1} parent=1 // pred_fallthru
      _
    %v38 = vld [vmem:[#allocation2] sm:$0xff]
    %v39 = vld [vmem:[#allocation5] sm:$0xff]
    %v40 = vld [vmem:[#allocation5 + $0x8] sm:$0xff]
    %v41 = vld [vmem:[#allocation5 + $0x10] sm:$0xff]
    %v42 = vld [vmem:[#allocation5 + $0x18] sm:$0xff]
    %v43 = vld [vmem:[#allocation5 + $0x20] sm:$0xff]
    %v44 = vld [vmem:[#allocation5 + $0x28] sm:$0xff]
    %v45 = vld [vmem:[#allocation5 + $0x30] sm:$0xff]
    %v46 = vld [vmem:[#allocation5 + $0x38] sm:$0xff]
    %v47 = vld [vmem:[#allocation5 + $0x40] sm:$0xff]
    %v48 = vld [vmem:[#allocation5 + $0x48] sm:$0xff]
    %v49 = vld [vmem:[#allocation5 + $0x50] sm:$0xff]
    %v50 = vld [vmem:[#allocation5 + $0x58] sm:$0xff]
    %v51 = vld [vmem:[#allocation5 + $0x60] sm:$0xff]
    %v52 = vld [vmem:[#allocation5 + $0x68] sm:$0xff]
    %v53 = vld [vmem:[#allocation5 + $0x70] sm:$0xff]
    %v54 = vld [vmem:[#allocation5 + $0x78] sm:$0xff]
    %v55 = vld [vmem:[#allocation5 + $0x80] sm:$0xff]
    %v56 = vld [vmem:[#allocation5 + $0x88] sm:$0xff]
    %v57 = vld [vmem:[#allocation5 + $0x90] sm:$0xff]
    %v58 = vld [vmem:[#allocation5 + $0x98] sm:$0xff]
    %v59 = vld [vmem:[#allocation5 + $0xa0] sm:$0xff]
    %v60 = vld [vmem:[#allocation5 + $0xa8] sm:$0xff]
    %v61 = vld [vmem:[#allocation5 + $0xb0] sm:$0xff]
    %v62 = vld [vmem:[#allocation5 + $0xb8] sm:$0xff]
    %v63 = vld [vmem:[#allocation5 + $0xc0] sm:$0xff]
    %v64 = vld [vmem:[#allocation5 + $0xc8] sm:$0xff]
    %v65 = vld [vmem:[#allocation5 + $0xd0] sm:$0xff]
    %v66 = vld [vmem:[#allocation5 + $0xd8] sm:$0xff]
    %v67 = vld [vmem:[#allocation5 + $0xe0] sm:$0xff]
    %v68 = vld [vmem:[#allocation5 + $0xe8] sm:$0xff]
    %v69 = vld [vmem:[#allocation5 + $0xf0] sm:$0xff]
    %v70 = vld [vmem:[#allocation5 + $0xf8] sm:$0xff]
    %v71 = vld [vmem:[#allocation5 + $0x100] sm:$0xff]
    %v72 = vld [vmem:[#allocation5 + $0x108] sm:$0xff]
    %v73 = vld [vmem:[#allocation5 + $0x110] sm:$0xff]
    %v74 = vld [vmem:[#allocation5 + $0x118] sm:$0xff]
    %v75 = vld [vmem:[#allocation5 + $0x120] sm:$0xff]
    %v76 = vld [vmem:[#allocation5 + $0x128] sm:$0xff]
    %v77 = vld [vmem:[#allocation5 + $0x130] sm:$0xff]
    %v78 = vld [vmem:[#allocation5 + $0x138] sm:$0xff]
    %v79 = vld [vmem:[#allocation5 + $0x140] sm:$0xff]
    %v80 = vld [vmem:[#allocation5 + $0x148] sm:$0xff]
    %v81 = vld [vmem:[#allocation5 + $0x150] sm:$0xff]
    %v82 = vld [vmem:[#allocation5 + $0x158] sm:$0xff]
    %v83 = vld [vmem:[#allocation5 + $0x160] sm:$0xff]
    %v84 = vld [vmem:[#allocation5 + $0x168] sm:$0xff]
    %v85 = vld [vmem:[#allocation5 + $0x170] sm:$0xff]
    %v86 = vld [vmem:[#allocation5 + $0x178] sm:$0xff]
    %v87 = vld [vmem:[#allocation5 + $0x180] sm:$0xff]
    %v88 = vld [vmem:[#allocation5 + $0x188] sm:$0xff]
    %v89 = vld [vmem:[#allocation5 + $0x190] sm:$0xff]
    %v90 = vld [vmem:[#allocation5 + $0x198] sm:$0xff]
    %v91 = vld [vmem:[#allocation5 + $0x1a0] sm:$0xff]
    %v92 = vld [vmem:[#allocation5 + $0x1a8] sm:$0xff]
    %v93 = vld [vmem:[#allocation5 + $0x1b0] sm:$0xff]
    %v94 = vld [vmem:[#allocation5 + $0x1b8] sm:$0xff]
    %v95 = vld [vmem:[#allocation5 + $0x1c0] sm:$0xff]
    %v96 = vld [vmem:[#allocation5 + $0x1c8] sm:$0xff]
    %v97 = vld [vmem:[#allocation5 + $0x1d0] sm:$0xff]
    %v98 = vld [vmem:[#allocation5 + $0x1d8] sm:$0xff]
    %v99 = vld [vmem:[#allocation5 + $0x1e0] sm:$0xff]
    %v100 = vld [vmem:[#allocation5 + $0x1e8] sm:$0xff]
    %v101 = vld [vmem:[#allocation5 + $0x1f0] sm:$0xff]
    %v102 = vld [vmem:[#allocation5 + $0x1f8] sm:$0xff]
    %103 = vmatprep.subr.mxu0 %v40
    %104 = vmatpush1.msra.mxu0 %v39
    %105 = vmatprep.subr.mxu0 %v44
    %106 = vmatpush1.msra.mxu0 %v43
    %107 = vmatprep.subr.mxu0 %v48
    %108 = vmatpush1.msra.mxu0 %v47
    %109 = vmatprep.subr.mxu0 %v52
    %110 = vmatpush1.msra.mxu0 %v51
    %111 = vmatprep.subr.mxu0 %v56
    %112 = vmatpush1.msra.mxu0 %v55
    %113 = vmatprep.subr.mxu0 %v60
    %114 = vmatpush1.msra.mxu0 %v59
    %115 = vmatprep.subr.mxu0 %v64
    %116 = vmatpush1.msra.mxu0 %v63
    %117 = vmatprep.subr.mxu0 %v68
    %118 = vmatpush1.msra.mxu0 %v67
    %119 = vmatprep.subr.mxu0 %v72
    %120 = vmatpush1.msra.mxu0 %v71
    %121 = vmatprep.subr.mxu0 %v76
    %122 = vmatpush1.msra.mxu0 %v75
    %123 = vmatprep.subr.mxu0 %v80
    %124 = vmatpush1.msra.mxu0 %v79
    %125 = vmatprep.subr.mxu0 %v84
    %126 = vmatpush1.msra.mxu0 %v83
    %127 = vmatprep.subr.mxu0 %v88
    %128 = vmatpush1.msra.mxu0 %v87
    %129 = vmatprep.subr.mxu0 %v92
    %130 = vmatpush1.msra.mxu0 %v91
    %131 = vmatprep.subr.mxu0 %v96
    %132 = vmatpush1.msra.mxu0 %v95
    %133 = vmatprep.subr.mxu0 %v100
    %134 = vmatpush1.msra.mxu0 %v99
    %135 = vmatprep.subr.mxu0 0.0
    %136 = vmatpush1.msra.mxu0 0.0
    %137 = vmatprep.subr.mxu0 0.0
    %138 = vmatpush1.msra.mxu0 0.0
    %139 = vmatprep.subr.mxu0 0.0
    %140 = vmatpush1.msra.mxu0 0.0
    %141 = vmatprep.subr.mxu0 0.0
    %142 = vmatpush1.msra.mxu0 0.0
    %143 = vmatprep.subr.mxu0 0.0
    %144 = vmatpush1.msra.mxu0 0.0
    %145 = vmatprep.subr.mxu0 0.0
    %146 = vmatpush1.msra.mxu0 0.0
    %147 = vmatprep.subr.mxu0 0.0
    %148 = vmatpush1.msra.mxu0 0.0
    %149 = vmatprep.subr.mxu0 0.0
    %150 = vmatpush1.msra.mxu0 0.0
    %151 = vmatprep.subr.mxu0 0.0
    %152 = vmatpush1.msra.mxu0 0.0
    %153 = vmatprep.subr.mxu0 0.0
    %154 = vmatpush1.msra.mxu0 0.0
    %155 = vmatprep.subr.mxu0 0.0
    %156 = vmatpush1.msra.mxu0 0.0
    %157 = vmatprep.subr.mxu0 0.0
    %158 = vmatpush1.msra.mxu0 0.0
    %159 = vmatprep.subr.mxu0 0.0
    %160 = vmatpush1.msra.mxu0 0.0
    %161 = vmatprep.subr.mxu0 0.0
    %162 = vmatpush1.msra.mxu0 0.0
    %163 = vmatprep.subr.mxu0 0.0
    %164 = vmatpush1.msra.mxu0 0.0
    %165 = vmatprep.subr.mxu0 0.0
    %166 = vmatpush1.msra.mxu0 0.0
    %167 = vmatprep.mubr.f32.mxu0 0.0
    %168 = vmatmul.mubr.f32.gmra.mrb[0].mxu0 %v38
    %v169 = vpop.f32.mrb[0].mxu0
    %v170 = vadd.f32 0.0, %v169
    %v171 = vpop.f32.mrb[0].mxu0
    %v172 = vadd.f32 0.0, %v171
    %173 = vdwg.mxu0
    %174 = vmatprep.subr.mxu0 %v42
    %175 = vmatpush1.msra.mxu0 %v41
    %176 = vmatprep.subr.mxu0 %v46
    %177 = vmatpush1.msra.mxu0 %v45
    %178 = vmatprep.subr.mxu0 %v50
    %179 = vmatpush1.msra.mxu0 %v49
    %180 = vmatprep.subr.mxu0 %v54
    %181 = vmatpush1.msra.mxu0 %v53
    %182 = vmatprep.subr.mxu0 %v58
    %183 = vmatpush1.msra.mxu0 %v57
    %184 = vmatprep.subr.mxu0 %v62
    %185 = vmatpush1.msra.mxu0 %v61
    %186 = vmatprep.subr.mxu0 %v66
    %187 = vmatpush1.msra.mxu0 %v65
    %188 = vmatprep.subr.mxu0 %v70
    %189 = vmatpush1.msra.mxu0 %v69
    %190 = vmatprep.subr.mxu0 %v74
    %191 = vmatpush1.msra.mxu0 %v73
    %192 = vmatprep.subr.mxu0 %v78
    %193 = vmatpush1.msra.mxu0 %v77
    %194 = vmatprep.subr.mxu0 %v82
    %195 = vmatpush1.msra.mxu0 %v81
    %196 = vmatprep.subr.mxu0 %v86
    %197 = vmatpush1.msra.mxu0 %v85
    %198 = vmatprep.subr.mxu0 %v90
    %199 = vmatpush1.msra.mxu0 %v89
    %200 = vmatprep.subr.mxu0 %v94
    %201 = vmatpush1.msra.mxu0 %v93
    %202 = vmatprep.subr.mxu0 %v98
    %203 = vmatpush1.msra.mxu0 %v97
    %204 = vmatprep.subr.mxu0 %v102
    %205 = vmatpush1.msra.mxu0 %v101
    %206 = vmatprep.subr.mxu0 0.0
    %207 = vmatpush1.msra.mxu0 0.0
    %208 = vmatprep.subr.mxu0 0.0
    %209 = vmatpush1.msra.mxu0 0.0
    %210 = vmatprep.subr.mxu0 0.0
    %211 = vmatpush1.msra.mxu0 0.0
    %212 = vmatprep.subr.mxu0 0.0
    %213 = vmatpush1.msra.mxu0 0.0
    %214 = vmatprep.subr.mxu0 0.0
    %215 = vmatpush1.msra.mxu0 0.0
    %216 = vmatprep.subr.mxu0 0.0
    %217 = vmatpush1.msra.mxu0 0.0
    %218 = vmatprep.subr.mxu0 0.0
    %219 = vmatpush1.msra.mxu0 0.0
    %220 = vmatprep.subr.mxu0 0.0
    %221 = vmatpush1.msra.mxu0 0.0
    %222 = vmatprep.subr.mxu0 0.0
    %223 = vmatpush1.msra.mxu0 0.0
    %224 = vmatprep.subr.mxu0 0.0
    %225 = vmatpush1.msra.mxu0 0.0
    %226 = vmatprep.subr.mxu0 0.0
    %227 = vmatpush1.msra.mxu0 0.0
    %228 = vmatprep.subr.mxu0 0.0
    %229 = vmatpush1.msra.mxu0 0.0
    %230 = vmatprep.subr.mxu0 0.0
    %231 = vmatpush1.msra.mxu0 0.0
    %232 = vmatprep.subr.mxu0 0.0
    %233 = vmatpush1.msra.mxu0 0.0
    %234 = vmatprep.subr.mxu0 0.0
    %235 = vmatpush1.msra.mxu0 0.0
    %236 = vmatprep.subr.mxu0 0.0
    %237 = vmatpush1.msra.mxu0 0.0
    %238 = vmatprep.mubr.f32.mxu0 0.0
    %239 = vmatmul.mubr.f32.gmra.mrb[0].mxu0 %v38
    %v240 = vpop.f32.mrb[0].mxu0
    %v241 = vadd.f32 0.0, %v240
    %v242 = vpop.f32.mrb[0].mxu0
    %v243 = vadd.f32 0.0, %v242
    %244 = vdwg.mxu0
    %245 = vst [vmem:[#allocation7] sm:$0xff] %v170
    %246 = vst [vmem:[#allocation7 + $0x8] sm:$0xff] %v172
    %247 = vst [vmem:[#allocation7 + $0x10] sm:$0xff] %v241
    %248 = vst [vmem:[#allocation7 + $0x18] sm:$0xff] %v243
    // Predicated region
    $region18: #{tpu_custom_call.1} parent=1 // pred_check
      _
    $region19: #{tpu_custom_call.1} parent=1 // pred_check_branch
      %250 = sbr.rel (0) target = $region21
    $region20: #{tpu_custom_call.1} parent=1 // pred_region
      %s252 = ssub.s32 512, 512
      %253 = vsyncadd [#allocation4], %s252
      %s255 = sshll.u32 [#allocation7], 4
      %s256 = int_to_ptr.vmem [resolvable:$true] %s255
      %258 = dma.vmem_to_hbm [thread:$0]  %s256, 512, %s2, [#allocation4]
    $region21: #{tpu_custom_call.1} parent=1 // pred_fallthru
      _
    // Predicated region
    $region22: #{tpu_custom_call.1} parent=1 // pred_check
      _
    $region23: #{tpu_custom_call.1} parent=1 // pred_check_branch
      %260 = sbr.rel (0) target = $region25
    $region24: #{tpu_custom_call.1} parent=1 // pred_region
      %261 = dma.done [#allocation4], 512
    $region25: #{tpu_custom_call.1} parent=1 // pred_fallthru
      _
    %262 = vsyncpa [#allocation3], 1
    %263 = vsyncpa [#allocation6], 1
    %264 = vsyncpa [#allocation4], 1

</llo_original>
